<compile_context>
chip_gen: v7x
topology: tpu7x:2x2x1
jax: 0.10.0
libtpu: 0.0.40
codegen_flags: <defaults>
</compile_context>

<pallas_src>
import jax
import jax.numpy as jnp
from jax.experimental import pallas as pl
from jax.experimental.pallas import tpu as pltpu


def skipgram_kernel(in_ids_ref, ctx_ids_ref,     # SMEM scalar-prefetch: (B,) int32 each
                    in_tab_hbm, ctx_tab_hbm,     # (V, D) embedding tables, left in HBM
                    w_ref, b_ref,                # (1, D) weight row in VMEM, (1,) bias in SMEM
                    out_ref,                     # (1, B) lane-dense output
                    ei_buf, ec_buf,              # (B, D) VMEM gather buffers
                    in_sems, ctx_sems):          # (B,) DMA semaphores each
    B, D = ei_buf.shape

    # --- Gather: DMA only the B needed rows (2*B*D*4 bytes of HBM traffic) ---
    copies = []
    for i in range(B):  # B is small & static; issuing DMAs is pure scalar work
        ii = in_ids_ref[i]
        ci = ctx_ids_ref[i]
        cp_in = pltpu.make_async_copy(in_tab_hbm.at[pl.ds(ii, 1), :],
                                      ei_buf.at[pl.ds(i, 1), :],
                                      in_sems.at[i])
        cp_ctx = pltpu.make_async_copy(ctx_tab_hbm.at[pl.ds(ci, 1), :],
                                       ec_buf.at[pl.ds(i, 1), :],
                                       ctx_sems.at[i])
        cp_in.start()
        cp_ctx.start()
        copies.append((cp_in, cp_ctx))
    for cp_in, cp_ctx in copies:
        cp_in.wait()
        cp_ctx.wait()

    # --- Fused compute: VPU multiply + XLU lane reduction + EUP sigmoid -----
    # (ei * ec) @ W.T  ==  sum(ei * ec * w_row, axis=-1)   (no MXU needed)
    prod = ei_buf[...] * ec_buf[...] * w_ref[...]          # (B, D)
    score = jnp.sum(prod, axis=-1) + b_ref[0]              # (B,)
    out_ref[...] = jax.nn.sigmoid(score).reshape(1, B)     # lane-dense store


def skipgram_forward(input_pos, context_pos, in_table, ctx_table, w_row, bias):
    """input_pos/context_pos: (B,) int32; tables: (V, D) f32;
    w_row: (1, D) f32 (Linear weight); bias: (1,) f32.  Returns (B,) f32."""
    B = input_pos.shape[0]
    V, D = in_table.shape

    out = pl.pallas_call(
        skipgram_kernel,
        out_shape=jax.ShapeDtypeStruct((1, B), jnp.float32),
        grid_spec=pltpu.PrefetchScalarGridSpec(
            num_scalar_prefetch=2,              # input_pos, context_pos -> SMEM
            grid=(1,),
            in_specs=[
                pl.BlockSpec(memory_space=pl.ANY),               # input table stays in HBM
                pl.BlockSpec(memory_space=pl.ANY),               # context table stays in HBM
                pl.BlockSpec((1, D), lambda i, *_: (0, 0)),      # weight row -> VMEM
                pl.BlockSpec(memory_space=pltpu.MemorySpace.SMEM),  # bias scalar -> SMEM
            ],
            out_specs=pl.BlockSpec((1, B), lambda i, *_: (0, 0)),
            scratch_shapes=[
                pltpu.VMEM((B, D), jnp.float32),       # gathered input rows
                pltpu.VMEM((B, D), jnp.float32),       # gathered context rows
                pltpu.SemaphoreType.DMA((B,)),         # input-row DMA sems
                pltpu.SemaphoreType.DMA((B,)),         # context-row DMA sems
            ],
        ),
        compiler_params=pltpu.CompilerParams(
            dimension_semantics=("arbitrary",)),
    )(input_pos, context_pos, in_table, ctx_table, w_row, bias)

    return out[0]  # (1, B) -> (B,)  (the .squeeze())


if __name__ == "__main__":
    # Small, deterministic setup consistent with the module's __init__.
    vocab_size = 48
    embedding_dim = 128   # lane-aligned: one embedding row == one full vreg row
    batch = 8

    key = jax.random.PRNGKey(0)
    k_in, k_ctx, k_w, k_b, k_i, k_c = jax.random.split(key, 6)

    # nn.Embedding default init ~ N(0, 1); nn.Linear ~ U(-1/sqrt(D), 1/sqrt(D)).
    in_table = jax.random.normal(k_in, (vocab_size, embedding_dim), jnp.float32)
    ctx_table = jax.random.normal(k_ctx, (vocab_size, embedding_dim), jnp.float32)
    bound = 1.0 / (embedding_dim ** 0.5)
    w_row = jax.random.uniform(k_w, (1, embedding_dim), jnp.float32, -bound, bound)
    bias = jax.random.uniform(k_b, (1,), jnp.float32, -bound, bound)

    input_pos = jax.random.randint(k_i, (batch,), 0, vocab_size, dtype=jnp.int32)
    context_pos = jax.random.randint(k_c, (batch,), 0, vocab_size, dtype=jnp.int32)

    target = skipgram_forward(input_pos, context_pos,
                              in_table, ctx_table, w_row, bias)
    target = jax.block_until_ready(target)

    # Pure-JAX reference for a sanity check.
    ref = jax.nn.sigmoid(
        jnp.sum(in_table[input_pos] * ctx_table[context_pos] * w_row, axis=-1)
        + bias[0])
    assert target.shape == (batch,)
    assert jnp.allclose(target, ref, atol=1e-5, rtol=1e-5)

    print("KERNEL_OK")
</pallas_src>

<mosaic_0001>
module attributes {stable_mosaic.version = 11 : i64} {
  func.func @skipgram_kernel(%arg0: i32, %arg1: memref<8xi32, #tpu.memory_space<smem>>, %arg2: memref<8xi32, #tpu.memory_space<smem>>, %arg3: memref<48x128xf32, #tpu.memory_space<any>>, %arg4: memref<48x128xf32, #tpu.memory_space<any>>, %arg5: memref<1x128xf32, #tpu.memory_space<vmem>>, %arg6: memref<1xf32, #tpu.memory_space<smem>>, %arg7: memref<1x8xf32, #tpu.memory_space<vmem>>, %arg8: memref<8x128xf32, #tpu.memory_space<vmem>>, %arg9: memref<8x128xf32, #tpu.memory_space<vmem>>, %arg10: memref<8x!tpu.dma_semaphore, #tpu.memory_space<semaphore_mem>>, %arg11: memref<8x!tpu.dma_semaphore, #tpu.memory_space<semaphore_mem>>) attributes {dimension_semantics = [#tpu.dimension_semantics<arbitrary>], iteration_bounds = array<i64: 1>, scalar_prefetch = 2 : i64, scratch_operands = 4 : i64, tpu.core_type = #tpu.core_type<tc>, window_params = [{}, {}, {pipeline_mode = #tpu.pipeline_mode<synchronous>, transform_indices = @transform_2, window_bounds = array<i64: 1, 128>}, {transform_indices = @transform_3, window_bounds = array<i64: 1>}, {pipeline_mode = #tpu.pipeline_mode<synchronous>, transform_indices = @transform_4, window_bounds = array<i64: 1, 8>}]} {
    %c0 = arith.constant 0 : index
    %0 = memref.load %arg1[%c0] : memref<8xi32, #tpu.memory_space<smem>>
    %c0_0 = arith.constant 0 : index
    %1 = memref.load %arg2[%c0_0] : memref<8xi32, #tpu.memory_space<smem>>
    %c0_i32 = arith.constant 0 : i32
    %c0_i32_1 = arith.constant 0 : i32
    %2 = tpu.memref_slice %arg3[%0, %c0_i32_1] : memref<48x128xf32, #tpu.memory_space<any>> -> memref<1x128xf32, #tpu.memory_space<any>>
    %c0_i32_2 = arith.constant 0 : i32
    %c0_i32_3 = arith.constant 0 : i32
    %3 = tpu.memref_slice %arg8[%c0_i32_2, %c0_i32_3] : memref<8x128xf32, #tpu.memory_space<vmem>> -> memref<1x128xf32, #tpu.memory_space<vmem>>
    %4 = tpu.memref_slice %arg10[%c0_i32] : memref<8x!tpu.dma_semaphore, #tpu.memory_space<semaphore_mem>> -> memref<1x!tpu.dma_semaphore, #tpu.memory_space<semaphore_mem>>
    %5 = tpu.memref_squeeze %4 : memref<1x!tpu.dma_semaphore, #tpu.memory_space<semaphore_mem>> -> memref<!tpu.dma_semaphore, #tpu.memory_space<semaphore_mem>>
    tpu.enqueue_dma source(%2 : memref<1x128xf32, #tpu.memory_space<any>>) target(%3 : memref<1x128xf32, #tpu.memory_space<vmem>>) target_semaphore(%5 : memref<!tpu.dma_semaphore, #tpu.memory_space<semaphore_mem>>)
    %c0_i32_4 = arith.constant 0 : i32
    %c0_i32_5 = arith.constant 0 : i32
    %6 = tpu.memref_slice %arg4[%1, %c0_i32_5] : memref<48x128xf32, #tpu.memory_space<any>> -> memref<1x128xf32, #tpu.memory_space<any>>
    %c0_i32_6 = arith.constant 0 : i32
    %c0_i32_7 = arith.constant 0 : i32
    %7 = tpu.memref_slice %arg9[%c0_i32_6, %c0_i32_7] : memref<8x128xf32, #tpu.memory_space<vmem>> -> memref<1x128xf32, #tpu.memory_space<vmem>>
    %8 = tpu.memref_slice %arg11[%c0_i32_4] : memref<8x!tpu.dma_semaphore, #tpu.memory_space<semaphore_mem>> -> memref<1x!tpu.dma_semaphore, #tpu.memory_space<semaphore_mem>>
    %9 = tpu.memref_squeeze %8 : memref<1x!tpu.dma_semaphore, #tpu.memory_space<semaphore_mem>> -> memref<!tpu.dma_semaphore, #tpu.memory_space<semaphore_mem>>
    tpu.enqueue_dma source(%6 : memref<1x128xf32, #tpu.memory_space<any>>) target(%7 : memref<1x128xf32, #tpu.memory_space<vmem>>) target_semaphore(%9 : memref<!tpu.dma_semaphore, #tpu.memory_space<semaphore_mem>>)
    %c1 = arith.constant 1 : index
    %10 = memref.load %arg1[%c1] : memref<8xi32, #tpu.memory_space<smem>>
    %c1_8 = arith.constant 1 : index
    %11 = memref.load %arg2[%c1_8] : memref<8xi32, #tpu.memory_space<smem>>
    %c1_i32 = arith.constant 1 : i32
    %c0_i32_9 = arith.constant 0 : i32
    %12 = tpu.memref_slice %arg3[%10, %c0_i32_9] : memref<48x128xf32, #tpu.memory_space<any>> -> memref<1x128xf32, #tpu.memory_space<any>>
    %c1_i32_10 = arith.constant 1 : i32
    %c0_i32_11 = arith.constant 0 : i32
    %13 = tpu.memref_slice %arg8[%c1_i32_10, %c0_i32_11] : memref<8x128xf32, #tpu.memory_space<vmem>> -> memref<1x128xf32, #tpu.memory_space<vmem>>
    %14 = tpu.memref_slice %arg10[%c1_i32] : memref<8x!tpu.dma_semaphore, #tpu.memory_space<semaphore_mem>> -> memref<1x!tpu.dma_semaphore, #tpu.memory_space<semaphore_mem>>
    %15 = tpu.memref_squeeze %14 : memref<1x!tpu.dma_semaphore, #tpu.memory_space<semaphore_mem>> -> memref<!tpu.dma_semaphore, #tpu.memory_space<semaphore_mem>>
    tpu.enqueue_dma source(%12 : memref<1x128xf32, #tpu.memory_space<any>>) target(%13 : memref<1x128xf32, #tpu.memory_space<vmem>>) target_semaphore(%15 : memref<!tpu.dma_semaphore, #tpu.memory_space<semaphore_mem>>)
    %c1_i32_12 = arith.constant 1 : i32
    %c0_i32_13 = arith.constant 0 : i32
    %16 = tpu.memref_slice %arg4[%11, %c0_i32_13] : memref<48x128xf32, #tpu.memory_space<any>> -> memref<1x128xf32, #tpu.memory_space<any>>
    %c1_i32_14 = arith.constant 1 : i32
    %c0_i32_15 = arith.constant 0 : i32
    %17 = tpu.memref_slice %arg9[%c1_i32_14, %c0_i32_15] : memref<8x128xf32, #tpu.memory_space<vmem>> -> memref<1x128xf32, #tpu.memory_space<vmem>>
    %18 = tpu.memref_slice %arg11[%c1_i32_12] : memref<8x!tpu.dma_semaphore, #tpu.memory_space<semaphore_mem>> -> memref<1x!tpu.dma_semaphore, #tpu.memory_space<semaphore_mem>>
    %19 = tpu.memref_squeeze %18 : memref<1x!tpu.dma_semaphore, #tpu.memory_space<semaphore_mem>> -> memref<!tpu.dma_semaphore, #tpu.memory_space<semaphore_mem>>
    tpu.enqueue_dma source(%16 : memref<1x128xf32, #tpu.memory_space<any>>) target(%17 : memref<1x128xf32, #tpu.memory_space<vmem>>) target_semaphore(%19 : memref<!tpu.dma_semaphore, #tpu.memory_space<semaphore_mem>>)
    %c2 = arith.constant 2 : index
    %20 = memref.load %arg1[%c2] : memref<8xi32, #tpu.memory_space<smem>>
    %c2_16 = arith.constant 2 : index
    %21 = memref.load %arg2[%c2_16] : memref<8xi32, #tpu.memory_space<smem>>
    %c2_i32 = arith.constant 2 : i32
    %c0_i32_17 = arith.constant 0 : i32
    %22 = tpu.memref_slice %arg3[%20, %c0_i32_17] : memref<48x128xf32, #tpu.memory_space<any>> -> memref<1x128xf32, #tpu.memory_space<any>>
    %c2_i32_18 = arith.constant 2 : i32
    %c0_i32_19 = arith.constant 0 : i32
    %23 = tpu.memref_slice %arg8[%c2_i32_18, %c0_i32_19] : memref<8x128xf32, #tpu.memory_space<vmem>> -> memref<1x128xf32, #tpu.memory_space<vmem>>
    %24 = tpu.memref_slice %arg10[%c2_i32] : memref<8x!tpu.dma_semaphore, #tpu.memory_space<semaphore_mem>> -> memref<1x!tpu.dma_semaphore, #tpu.memory_space<semaphore_mem>>
    %25 = tpu.memref_squeeze %24 : memref<1x!tpu.dma_semaphore, #tpu.memory_space<semaphore_mem>> -> memref<!tpu.dma_semaphore, #tpu.memory_space<semaphore_mem>>
    tpu.enqueue_dma source(%22 : memref<1x128xf32, #tpu.memory_space<any>>) target(%23 : memref<1x128xf32, #tpu.memory_space<vmem>>) target_semaphore(%25 : memref<!tpu.dma_semaphore, #tpu.memory_space<semaphore_mem>>)
    %c2_i32_20 = arith.constant 2 : i32
    %c0_i32_21 = arith.constant 0 : i32
    %26 = tpu.memref_slice %arg4[%21, %c0_i32_21] : memref<48x128xf32, #tpu.memory_space<any>> -> memref<1x128xf32, #tpu.memory_space<any>>
    %c2_i32_22 = arith.constant 2 : i32
    %c0_i32_23 = arith.constant 0 : i32
    %27 = tpu.memref_slice %arg9[%c2_i32_22, %c0_i32_23] : memref<8x128xf32, #tpu.memory_space<vmem>> -> memref<1x128xf32, #tpu.memory_space<vmem>>
    %28 = tpu.memref_slice %arg11[%c2_i32_20] : memref<8x!tpu.dma_semaphore, #tpu.memory_space<semaphore_mem>> -> memref<1x!tpu.dma_semaphore, #tpu.memory_space<semaphore_mem>>
    %29 = tpu.memref_squeeze %28 : memref<1x!tpu.dma_semaphore, #tpu.memory_space<semaphore_mem>> -> memref<!tpu.dma_semaphore, #tpu.memory_space<semaphore_mem>>
    tpu.enqueue_dma source(%26 : memref<1x128xf32, #tpu.memory_space<any>>) target(%27 : memref<1x128xf32, #tpu.memory_space<vmem>>) target_semaphore(%29 : memref<!tpu.dma_semaphore, #tpu.memory_space<semaphore_mem>>)
    %c3 = arith.constant 3 : index
    %30 = memref.load %arg1[%c3] : memref<8xi32, #tpu.memory_space<smem>>
    %c3_24 = arith.constant 3 : index
    %31 = memref.load %arg2[%c3_24] : memref<8xi32, #tpu.memory_space<smem>>
    %c3_i32 = arith.constant 3 : i32
    %c0_i32_25 = arith.constant 0 : i32
    %32 = tpu.memref_slice %arg3[%30, %c0_i32_25] : memref<48x128xf32, #tpu.memory_space<any>> -> memref<1x128xf32, #tpu.memory_space<any>>
    %c3_i32_26 = arith.constant 3 : i32
    %c0_i32_27 = arith.constant 0 : i32
    %33 = tpu.memref_slice %arg8[%c3_i32_26, %c0_i32_27] : memref<8x128xf32, #tpu.memory_space<vmem>> -> memref<1x128xf32, #tpu.memory_space<vmem>>
    %34 = tpu.memref_slice %arg10[%c3_i32] : memref<8x!tpu.dma_semaphore, #tpu.memory_space<semaphore_mem>> -> memref<1x!tpu.dma_semaphore, #tpu.memory_space<semaphore_mem>>
    %35 = tpu.memref_squeeze %34 : memref<1x!tpu.dma_semaphore, #tpu.memory_space<semaphore_mem>> -> memref<!tpu.dma_semaphore, #tpu.memory_space<semaphore_mem>>
    tpu.enqueue_dma source(%32 : memref<1x128xf32, #tpu.memory_space<any>>) target(%33 : memref<1x128xf32, #tpu.memory_space<vmem>>) target_semaphore(%35 : memref<!tpu.dma_semaphore, #tpu.memory_space<semaphore_mem>>)
    %c3_i32_28 = arith.constant 3 : i32
    %c0_i32_29 = arith.constant 0 : i32
    %36 = tpu.memref_slice %arg4[%31, %c0_i32_29] : memref<48x128xf32, #tpu.memory_space<any>> -> memref<1x128xf32, #tpu.memory_space<any>>
    %c3_i32_30 = arith.constant 3 : i32
    %c0_i32_31 = arith.constant 0 : i32
    %37 = tpu.memref_slice %arg9[%c3_i32_30, %c0_i32_31] : memref<8x128xf32, #tpu.memory_space<vmem>> -> memref<1x128xf32, #tpu.memory_space<vmem>>
    %38 = tpu.memref_slice %arg11[%c3_i32_28] : memref<8x!tpu.dma_semaphore, #tpu.memory_space<semaphore_mem>> -> memref<1x!tpu.dma_semaphore, #tpu.memory_space<semaphore_mem>>
    %39 = tpu.memref_squeeze %38 : memref<1x!tpu.dma_semaphore, #tpu.memory_space<semaphore_mem>> -> memref<!tpu.dma_semaphore, #tpu.memory_space<semaphore_mem>>
    tpu.enqueue_dma source(%36 : memref<1x128xf32, #tpu.memory_space<any>>) target(%37 : memref<1x128xf32, #tpu.memory_space<vmem>>) target_semaphore(%39 : memref<!tpu.dma_semaphore, #tpu.memory_space<semaphore_mem>>)
    %c4 = arith.constant 4 : index
    %40 = memref.load %arg1[%c4] : memref<8xi32, #tpu.memory_space<smem>>
    %c4_32 = arith.constant 4 : index
    %41 = memref.load %arg2[%c4_32] : memref<8xi32, #tpu.memory_space<smem>>
    %c4_i32 = arith.constant 4 : i32
    %c0_i32_33 = arith.constant 0 : i32
    %42 = tpu.memref_slice %arg3[%40, %c0_i32_33] : memref<48x128xf32, #tpu.memory_space<any>> -> memref<1x128xf32, #tpu.memory_space<any>>
    %c4_i32_34 = arith.constant 4 : i32
    %c0_i32_35 = arith.constant 0 : i32
    %43 = tpu.memref_slice %arg8[%c4_i32_34, %c0_i32_35] : memref<8x128xf32, #tpu.memory_space<vmem>> -> memref<1x128xf32, #tpu.memory_space<vmem>>
    %44 = tpu.memref_slice %arg10[%c4_i32] : memref<8x!tpu.dma_semaphore, #tpu.memory_space<semaphore_mem>> -> memref<1x!tpu.dma_semaphore, #tpu.memory_space<semaphore_mem>>
    %45 = tpu.memref_squeeze %44 : memref<1x!tpu.dma_semaphore, #tpu.memory_space<semaphore_mem>> -> memref<!tpu.dma_semaphore, #tpu.memory_space<semaphore_mem>>
    tpu.enqueue_dma source(%42 : memref<1x128xf32, #tpu.memory_space<any>>) target(%43 : memref<1x128xf32, #tpu.memory_space<vmem>>) target_semaphore(%45 : memref<!tpu.dma_semaphore, #tpu.memory_space<semaphore_mem>>)
    %c4_i32_36 = arith.constant 4 : i32
    %c0_i32_37 = arith.constant 0 : i32
    %46 = tpu.memref_slice %arg4[%41, %c0_i32_37] : memref<48x128xf32, #tpu.memory_space<any>> -> memref<1x128xf32, #tpu.memory_space<any>>
    %c4_i32_38 = arith.constant 4 : i32
    %c0_i32_39 = arith.constant 0 : i32
    %47 = tpu.memref_slice %arg9[%c4_i32_38, %c0_i32_39] : memref<8x128xf32, #tpu.memory_space<vmem>> -> memref<1x128xf32, #tpu.memory_space<vmem>>
    %48 = tpu.memref_slice %arg11[%c4_i32_36] : memref<8x!tpu.dma_semaphore, #tpu.memory_space<semaphore_mem>> -> memref<1x!tpu.dma_semaphore, #tpu.memory_space<semaphore_mem>>
    %49 = tpu.memref_squeeze %48 : memref<1x!tpu.dma_semaphore, #tpu.memory_space<semaphore_mem>> -> memref<!tpu.dma_semaphore, #tpu.memory_space<semaphore_mem>>
    tpu.enqueue_dma source(%46 : memref<1x128xf32, #tpu.memory_space<any>>) target(%47 : memref<1x128xf32, #tpu.memory_space<vmem>>) target_semaphore(%49 : memref<!tpu.dma_semaphore, #tpu.memory_space<semaphore_mem>>)
    %c5 = arith.constant 5 : index
    %50 = memref.load %arg1[%c5] : memref<8xi32, #tpu.memory_space<smem>>
    %c5_40 = arith.constant 5 : index
    %51 = memref.load %arg2[%c5_40] : memref<8xi32, #tpu.memory_space<smem>>
    %c5_i32 = arith.constant 5 : i32
    %c0_i32_41 = arith.constant 0 : i32
    %52 = tpu.memref_slice %arg3[%50, %c0_i32_41] : memref<48x128xf32, #tpu.memory_space<any>> -> memref<1x128xf32, #tpu.memory_space<any>>
    %c5_i32_42 = arith.constant 5 : i32
    %c0_i32_43 = arith.constant 0 : i32
    %53 = tpu.memref_slice %arg8[%c5_i32_42, %c0_i32_43] : memref<8x128xf32, #tpu.memory_space<vmem>> -> memref<1x128xf32, #tpu.memory_space<vmem>>
    %54 = tpu.memref_slice %arg10[%c5_i32] : memref<8x!tpu.dma_semaphore, #tpu.memory_space<semaphore_mem>> -> memref<1x!tpu.dma_semaphore, #tpu.memory_space<semaphore_mem>>
    %55 = tpu.memref_squeeze %54 : memref<1x!tpu.dma_semaphore, #tpu.memory_space<semaphore_mem>> -> memref<!tpu.dma_semaphore, #tpu.memory_space<semaphore_mem>>
    tpu.enqueue_dma source(%52 : memref<1x128xf32, #tpu.memory_space<any>>) target(%53 : memref<1x128xf32, #tpu.memory_space<vmem>>) target_semaphore(%55 : memref<!tpu.dma_semaphore, #tpu.memory_space<semaphore_mem>>)
    %c5_i32_44 = arith.constant 5 : i32
    %c0_i32_45 = arith.constant 0 : i32
    %56 = tpu.memref_slice %arg4[%51, %c0_i32_45] : memref<48x128xf32, #tpu.memory_space<any>> -> memref<1x128xf32, #tpu.memory_space<any>>
    %c5_i32_46 = arith.constant 5 : i32
    %c0_i32_47 = arith.constant 0 : i32
    %57 = tpu.memref_slice %arg9[%c5_i32_46, %c0_i32_47] : memref<8x128xf32, #tpu.memory_space<vmem>> -> memref<1x128xf32, #tpu.memory_space<vmem>>
    %58 = tpu.memref_slice %arg11[%c5_i32_44] : memref<8x!tpu.dma_semaphore, #tpu.memory_space<semaphore_mem>> -> memref<1x!tpu.dma_semaphore, #tpu.memory_space<semaphore_mem>>
    %59 = tpu.memref_squeeze %58 : memref<1x!tpu.dma_semaphore, #tpu.memory_space<semaphore_mem>> -> memref<!tpu.dma_semaphore, #tpu.memory_space<semaphore_mem>>
    tpu.enqueue_dma source(%56 : memref<1x128xf32, #tpu.memory_space<any>>) target(%57 : memref<1x128xf32, #tpu.memory_space<vmem>>) target_semaphore(%59 : memref<!tpu.dma_semaphore, #tpu.memory_space<semaphore_mem>>)
    %c6 = arith.constant 6 : index
    %60 = memref.load %arg1[%c6] : memref<8xi32, #tpu.memory_space<smem>>
    %c6_48 = arith.constant 6 : index
    %61 = memref.load %arg2[%c6_48] : memref<8xi32, #tpu.memory_space<smem>>
    %c6_i32 = arith.constant 6 : i32
    %c0_i32_49 = arith.constant 0 : i32
    %62 = tpu.memref_slice %arg3[%60, %c0_i32_49] : memref<48x128xf32, #tpu.memory_space<any>> -> memref<1x128xf32, #tpu.memory_space<any>>
    %c6_i32_50 = arith.constant 6 : i32
    %c0_i32_51 = arith.constant 0 : i32
    %63 = tpu.memref_slice %arg8[%c6_i32_50, %c0_i32_51] : memref<8x128xf32, #tpu.memory_space<vmem>> -> memref<1x128xf32, #tpu.memory_space<vmem>>
    %64 = tpu.memref_slice %arg10[%c6_i32] : memref<8x!tpu.dma_semaphore, #tpu.memory_space<semaphore_mem>> -> memref<1x!tpu.dma_semaphore, #tpu.memory_space<semaphore_mem>>
    %65 = tpu.memref_squeeze %64 : memref<1x!tpu.dma_semaphore, #tpu.memory_space<semaphore_mem>> -> memref<!tpu.dma_semaphore, #tpu.memory_space<semaphore_mem>>
    tpu.enqueue_dma source(%62 : memref<1x128xf32, #tpu.memory_space<any>>) target(%63 : memref<1x128xf32, #tpu.memory_space<vmem>>) target_semaphore(%65 : memref<!tpu.dma_semaphore, #tpu.memory_space<semaphore_mem>>)
    %c6_i32_52 = arith.constant 6 : i32
    %c0_i32_53 = arith.constant 0 : i32
    %66 = tpu.memref_slice %arg4[%61, %c0_i32_53] : memref<48x128xf32, #tpu.memory_space<any>> -> memref<1x128xf32, #tpu.memory_space<any>>
    %c6_i32_54 = arith.constant 6 : i32
    %c0_i32_55 = arith.constant 0 : i32
    %67 = tpu.memref_slice %arg9[%c6_i32_54, %c0_i32_55] : memref<8x128xf32, #tpu.memory_space<vmem>> -> memref<1x128xf32, #tpu.memory_space<vmem>>
    %68 = tpu.memref_slice %arg11[%c6_i32_52] : memref<8x!tpu.dma_semaphore, #tpu.memory_space<semaphore_mem>> -> memref<1x!tpu.dma_semaphore, #tpu.memory_space<semaphore_mem>>
    %69 = tpu.memref_squeeze %68 : memref<1x!tpu.dma_semaphore, #tpu.memory_space<semaphore_mem>> -> memref<!tpu.dma_semaphore, #tpu.memory_space<semaphore_mem>>
    tpu.enqueue_dma source(%66 : memref<1x128xf32, #tpu.memory_space<any>>) target(%67 : memref<1x128xf32, #tpu.memory_space<vmem>>) target_semaphore(%69 : memref<!tpu.dma_semaphore, #tpu.memory_space<semaphore_mem>>)
    %c7 = arith.constant 7 : index
    %70 = memref.load %arg1[%c7] : memref<8xi32, #tpu.memory_space<smem>>
    %c7_56 = arith.constant 7 : index
    %71 = memref.load %arg2[%c7_56] : memref<8xi32, #tpu.memory_space<smem>>
    %c7_i32 = arith.constant 7 : i32
    %c0_i32_57 = arith.constant 0 : i32
    %72 = tpu.memref_slice %arg3[%70, %c0_i32_57] : memref<48x128xf32, #tpu.memory_space<any>> -> memref<1x128xf32, #tpu.memory_space<any>>
    %c7_i32_58 = arith.constant 7 : i32
    %c0_i32_59 = arith.constant 0 : i32
    %73 = tpu.memref_slice %arg8[%c7_i32_58, %c0_i32_59] : memref<8x128xf32, #tpu.memory_space<vmem>> -> memref<1x128xf32, #tpu.memory_space<vmem>>
    %74 = tpu.memref_slice %arg10[%c7_i32] : memref<8x!tpu.dma_semaphore, #tpu.memory_space<semaphore_mem>> -> memref<1x!tpu.dma_semaphore, #tpu.memory_space<semaphore_mem>>
    %75 = tpu.memref_squeeze %74 : memref<1x!tpu.dma_semaphore, #tpu.memory_space<semaphore_mem>> -> memref<!tpu.dma_semaphore, #tpu.memory_space<semaphore_mem>>
    tpu.enqueue_dma source(%72 : memref<1x128xf32, #tpu.memory_space<any>>) target(%73 : memref<1x128xf32, #tpu.memory_space<vmem>>) target_semaphore(%75 : memref<!tpu.dma_semaphore, #tpu.memory_space<semaphore_mem>>)
    %c7_i32_60 = arith.constant 7 : i32
    %c0_i32_61 = arith.constant 0 : i32
    %76 = tpu.memref_slice %arg4[%71, %c0_i32_61] : memref<48x128xf32, #tpu.memory_space<any>> -> memref<1x128xf32, #tpu.memory_space<any>>
    %c7_i32_62 = arith.constant 7 : i32
    %c0_i32_63 = arith.constant 0 : i32
    %77 = tpu.memref_slice %arg9[%c7_i32_62, %c0_i32_63] : memref<8x128xf32, #tpu.memory_space<vmem>> -> memref<1x128xf32, #tpu.memory_space<vmem>>
    %78 = tpu.memref_slice %arg11[%c7_i32_60] : memref<8x!tpu.dma_semaphore, #tpu.memory_space<semaphore_mem>> -> memref<1x!tpu.dma_semaphore, #tpu.memory_space<semaphore_mem>>
    %79 = tpu.memref_squeeze %78 : memref<1x!tpu.dma_semaphore, #tpu.memory_space<semaphore_mem>> -> memref<!tpu.dma_semaphore, #tpu.memory_space<semaphore_mem>>
    tpu.enqueue_dma source(%76 : memref<1x128xf32, #tpu.memory_space<any>>) target(%77 : memref<1x128xf32, #tpu.memory_space<vmem>>) target_semaphore(%79 : memref<!tpu.dma_semaphore, #tpu.memory_space<semaphore_mem>>)
    %c0_i32_64 = arith.constant 0 : i32
    %c0_i32_65 = arith.constant 0 : i32
    %80 = tpu.memref_slice %arg3[%0, %c0_i32_65] : memref<48x128xf32, #tpu.memory_space<any>> -> memref<1x128xf32, #tpu.memory_space<any>>
    %c0_i32_66 = arith.constant 0 : i32
    %c0_i32_67 = arith.constant 0 : i32
    %81 = tpu.memref_slice %arg8[%c0_i32_66, %c0_i32_67] : memref<8x128xf32, #tpu.memory_space<vmem>> -> memref<1x128xf32, #tpu.memory_space<vmem>>
    %82 = tpu.memref_slice %arg10[%c0_i32_64] : memref<8x!tpu.dma_semaphore, #tpu.memory_space<semaphore_mem>> -> memref<1x!tpu.dma_semaphore, #tpu.memory_space<semaphore_mem>>
    %83 = tpu.memref_squeeze %82 : memref<1x!tpu.dma_semaphore, #tpu.memory_space<semaphore_mem>> -> memref<!tpu.dma_semaphore, #tpu.memory_space<semaphore_mem>>
    tpu.wait_dma2 semaphore(%83 : memref<!tpu.dma_semaphore, #tpu.memory_space<semaphore_mem>>) src(%80 : memref<1x128xf32, #tpu.memory_space<any>>) dst(%81 : memref<1x128xf32, #tpu.memory_space<vmem>>)
    %c0_i32_68 = arith.constant 0 : i32
    %c0_i32_69 = arith.constant 0 : i32
    %84 = tpu.memref_slice %arg4[%1, %c0_i32_69] : memref<48x128xf32, #tpu.memory_space<any>> -> memref<1x128xf32, #tpu.memory_space<any>>
    %c0_i32_70 = arith.constant 0 : i32
    %c0_i32_71 = arith.constant 0 : i32
    %85 = tpu.memref_slice %arg9[%c0_i32_70, %c0_i32_71] : memref<8x128xf32, #tpu.memory_space<vmem>> -> memref<1x128xf32, #tpu.memory_space<vmem>>
    %86 = tpu.memref_slice %arg11[%c0_i32_68] : memref<8x!tpu.dma_semaphore, #tpu.memory_space<semaphore_mem>> -> memref<1x!tpu.dma_semaphore, #tpu.memory_space<semaphore_mem>>
    %87 = tpu.memref_squeeze %86 : memref<1x!tpu.dma_semaphore, #tpu.memory_space<semaphore_mem>> -> memref<!tpu.dma_semaphore, #tpu.memory_space<semaphore_mem>>
    tpu.wait_dma2 semaphore(%87 : memref<!tpu.dma_semaphore, #tpu.memory_space<semaphore_mem>>) src(%84 : memref<1x128xf32, #tpu.memory_space<any>>) dst(%85 : memref<1x128xf32, #tpu.memory_space<vmem>>)
    %c1_i32_72 = arith.constant 1 : i32
    %c0_i32_73 = arith.constant 0 : i32
    %88 = tpu.memref_slice %arg3[%10, %c0_i32_73] : memref<48x128xf32, #tpu.memory_space<any>> -> memref<1x128xf32, #tpu.memory_space<any>>
    %c1_i32_74 = arith.constant 1 : i32
    %c0_i32_75 = arith.constant 0 : i32
    %89 = tpu.memref_slice %arg8[%c1_i32_74, %c0_i32_75] : memref<8x128xf32, #tpu.memory_space<vmem>> -> memref<1x128xf32, #tpu.memory_space<vmem>>
    %90 = tpu.memref_slice %arg10[%c1_i32_72] : memref<8x!tpu.dma_semaphore, #tpu.memory_space<semaphore_mem>> -> memref<1x!tpu.dma_semaphore, #tpu.memory_space<semaphore_mem>>
    %91 = tpu.memref_squeeze %90 : memref<1x!tpu.dma_semaphore, #tpu.memory_space<semaphore_mem>> -> memref<!tpu.dma_semaphore, #tpu.memory_space<semaphore_mem>>
    tpu.wait_dma2 semaphore(%91 : memref<!tpu.dma_semaphore, #tpu.memory_space<semaphore_mem>>) src(%88 : memref<1x128xf32, #tpu.memory_space<any>>) dst(%89 : memref<1x128xf32, #tpu.memory_space<vmem>>)
    %c1_i32_76 = arith.constant 1 : i32
    %c0_i32_77 = arith.constant 0 : i32
    %92 = tpu.memref_slice %arg4[%11, %c0_i32_77] : memref<48x128xf32, #tpu.memory_space<any>> -> memref<1x128xf32, #tpu.memory_space<any>>
    %c1_i32_78 = arith.constant 1 : i32
    %c0_i32_79 = arith.constant 0 : i32
    %93 = tpu.memref_slice %arg9[%c1_i32_78, %c0_i32_79] : memref<8x128xf32, #tpu.memory_space<vmem>> -> memref<1x128xf32, #tpu.memory_space<vmem>>
    %94 = tpu.memref_slice %arg11[%c1_i32_76] : memref<8x!tpu.dma_semaphore, #tpu.memory_space<semaphore_mem>> -> memref<1x!tpu.dma_semaphore, #tpu.memory_space<semaphore_mem>>
    %95 = tpu.memref_squeeze %94 : memref<1x!tpu.dma_semaphore, #tpu.memory_space<semaphore_mem>> -> memref<!tpu.dma_semaphore, #tpu.memory_space<semaphore_mem>>
    tpu.wait_dma2 semaphore(%95 : memref<!tpu.dma_semaphore, #tpu.memory_space<semaphore_mem>>) src(%92 : memref<1x128xf32, #tpu.memory_space<any>>) dst(%93 : memref<1x128xf32, #tpu.memory_space<vmem>>)
    %c2_i32_80 = arith.constant 2 : i32
    %c0_i32_81 = arith.constant 0 : i32
    %96 = tpu.memref_slice %arg3[%20, %c0_i32_81] : memref<48x128xf32, #tpu.memory_space<any>> -> memref<1x128xf32, #tpu.memory_space<any>>
    %c2_i32_82 = arith.constant 2 : i32
    %c0_i32_83 = arith.constant 0 : i32
    %97 = tpu.memref_slice %arg8[%c2_i32_82, %c0_i32_83] : memref<8x128xf32, #tpu.memory_space<vmem>> -> memref<1x128xf32, #tpu.memory_space<vmem>>
    %98 = tpu.memref_slice %arg10[%c2_i32_80] : memref<8x!tpu.dma_semaphore, #tpu.memory_space<semaphore_mem>> -> memref<1x!tpu.dma_semaphore, #tpu.memory_space<semaphore_mem>>
    %99 = tpu.memref_squeeze %98 : memref<1x!tpu.dma_semaphore, #tpu.memory_space<semaphore_mem>> -> memref<!tpu.dma_semaphore, #tpu.memory_space<semaphore_mem>>
    tpu.wait_dma2 semaphore(%99 : memref<!tpu.dma_semaphore, #tpu.memory_space<semaphore_mem>>) src(%96 : memref<1x128xf32, #tpu.memory_space<any>>) dst(%97 : memref<1x128xf32, #tpu.memory_space<vmem>>)
    %c2_i32_84 = arith.constant 2 : i32
    %c0_i32_85 = arith.constant 0 : i32
    %100 = tpu.memref_slice %arg4[%21, %c0_i32_85] : memref<48x128xf32, #tpu.memory_space<any>> -> memref<1x128xf32, #tpu.memory_space<any>>
    %c2_i32_86 = arith.constant 2 : i32
    %c0_i32_87 = arith.constant 0 : i32
    %101 = tpu.memref_slice %arg9[%c2_i32_86, %c0_i32_87] : memref<8x128xf32, #tpu.memory_space<vmem>> -> memref<1x128xf32, #tpu.memory_space<vmem>>
    %102 = tpu.memref_slice %arg11[%c2_i32_84] : memref<8x!tpu.dma_semaphore, #tpu.memory_space<semaphore_mem>> -> memref<1x!tpu.dma_semaphore, #tpu.memory_space<semaphore_mem>>
    %103 = tpu.memref_squeeze %102 : memref<1x!tpu.dma_semaphore, #tpu.memory_space<semaphore_mem>> -> memref<!tpu.dma_semaphore, #tpu.memory_space<semaphore_mem>>
    tpu.wait_dma2 semaphore(%103 : memref<!tpu.dma_semaphore, #tpu.memory_space<semaphore_mem>>) src(%100 : memref<1x128xf32, #tpu.memory_space<any>>) dst(%101 : memref<1x128xf32, #tpu.memory_space<vmem>>)
    %c3_i32_88 = arith.constant 3 : i32
    %c0_i32_89 = arith.constant 0 : i32
    %104 = tpu.memref_slice %arg3[%30, %c0_i32_89] : memref<48x128xf32, #tpu.memory_space<any>> -> memref<1x128xf32, #tpu.memory_space<any>>
    %c3_i32_90 = arith.constant 3 : i32
    %c0_i32_91 = arith.constant 0 : i32
    %105 = tpu.memref_slice %arg8[%c3_i32_90, %c0_i32_91] : memref<8x128xf32, #tpu.memory_space<vmem>> -> memref<1x128xf32, #tpu.memory_space<vmem>>
    %106 = tpu.memref_slice %arg10[%c3_i32_88] : memref<8x!tpu.dma_semaphore, #tpu.memory_space<semaphore_mem>> -> memref<1x!tpu.dma_semaphore, #tpu.memory_space<semaphore_mem>>
    %107 = tpu.memref_squeeze %106 : memref<1x!tpu.dma_semaphore, #tpu.memory_space<semaphore_mem>> -> memref<!tpu.dma_semaphore, #tpu.memory_space<semaphore_mem>>
    tpu.wait_dma2 semaphore(%107 : memref<!tpu.dma_semaphore, #tpu.memory_space<semaphore_mem>>) src(%104 : memref<1x128xf32, #tpu.memory_space<any>>) dst(%105 : memref<1x128xf32, #tpu.memory_space<vmem>>)
    %c3_i32_92 = arith.constant 3 : i32
    %c0_i32_93 = arith.constant 0 : i32
    %108 = tpu.memref_slice %arg4[%31, %c0_i32_93] : memref<48x128xf32, #tpu.memory_space<any>> -> memref<1x128xf32, #tpu.memory_space<any>>
    %c3_i32_94 = arith.constant 3 : i32
    %c0_i32_95 = arith.constant 0 : i32
    %109 = tpu.memref_slice %arg9[%c3_i32_94, %c0_i32_95] : memref<8x128xf32, #tpu.memory_space<vmem>> -> memref<1x128xf32, #tpu.memory_space<vmem>>
    %110 = tpu.memref_slice %arg11[%c3_i32_92] : memref<8x!tpu.dma_semaphore, #tpu.memory_space<semaphore_mem>> -> memref<1x!tpu.dma_semaphore, #tpu.memory_space<semaphore_mem>>
    %111 = tpu.memref_squeeze %110 : memref<1x!tpu.dma_semaphore, #tpu.memory_space<semaphore_mem>> -> memref<!tpu.dma_semaphore, #tpu.memory_space<semaphore_mem>>
    tpu.wait_dma2 semaphore(%111 : memref<!tpu.dma_semaphore, #tpu.memory_space<semaphore_mem>>) src(%108 : memref<1x128xf32, #tpu.memory_space<any>>) dst(%109 : memref<1x128xf32, #tpu.memory_space<vmem>>)
    %c4_i32_96 = arith.constant 4 : i32
    %c0_i32_97 = arith.constant 0 : i32
    %112 = tpu.memref_slice %arg3[%40, %c0_i32_97] : memref<48x128xf32, #tpu.memory_space<any>> -> memref<1x128xf32, #tpu.memory_space<any>>
    %c4_i32_98 = arith.constant 4 : i32
    %c0_i32_99 = arith.constant 0 : i32
    %113 = tpu.memref_slice %arg8[%c4_i32_98, %c0_i32_99] : memref<8x128xf32, #tpu.memory_space<vmem>> -> memref<1x128xf32, #tpu.memory_space<vmem>>
    %114 = tpu.memref_slice %arg10[%c4_i32_96] : memref<8x!tpu.dma_semaphore, #tpu.memory_space<semaphore_mem>> -> memref<1x!tpu.dma_semaphore, #tpu.memory_space<semaphore_mem>>
    %115 = tpu.memref_squeeze %114 : memref<1x!tpu.dma_semaphore, #tpu.memory_space<semaphore_mem>> -> memref<!tpu.dma_semaphore, #tpu.memory_space<semaphore_mem>>
    tpu.wait_dma2 semaphore(%115 : memref<!tpu.dma_semaphore, #tpu.memory_space<semaphore_mem>>) src(%112 : memref<1x128xf32, #tpu.memory_space<any>>) dst(%113 : memref<1x128xf32, #tpu.memory_space<vmem>>)
    %c4_i32_100 = arith.constant 4 : i32
    %c0_i32_101 = arith.constant 0 : i32
    %116 = tpu.memref_slice %arg4[%41, %c0_i32_101] : memref<48x128xf32, #tpu.memory_space<any>> -> memref<1x128xf32, #tpu.memory_space<any>>
    %c4_i32_102 = arith.constant 4 : i32
    %c0_i32_103 = arith.constant 0 : i32
    %117 = tpu.memref_slice %arg9[%c4_i32_102, %c0_i32_103] : memref<8x128xf32, #tpu.memory_space<vmem>> -> memref<1x128xf32, #tpu.memory_space<vmem>>
    %118 = tpu.memref_slice %arg11[%c4_i32_100] : memref<8x!tpu.dma_semaphore, #tpu.memory_space<semaphore_mem>> -> memref<1x!tpu.dma_semaphore, #tpu.memory_space<semaphore_mem>>
    %119 = tpu.memref_squeeze %118 : memref<1x!tpu.dma_semaphore, #tpu.memory_space<semaphore_mem>> -> memref<!tpu.dma_semaphore, #tpu.memory_space<semaphore_mem>>
    tpu.wait_dma2 semaphore(%119 : memref<!tpu.dma_semaphore, #tpu.memory_space<semaphore_mem>>) src(%116 : memref<1x128xf32, #tpu.memory_space<any>>) dst(%117 : memref<1x128xf32, #tpu.memory_space<vmem>>)
    %c5_i32_104 = arith.constant 5 : i32
    %c0_i32_105 = arith.constant 0 : i32
    %120 = tpu.memref_slice %arg3[%50, %c0_i32_105] : memref<48x128xf32, #tpu.memory_space<any>> -> memref<1x128xf32, #tpu.memory_space<any>>
    %c5_i32_106 = arith.constant 5 : i32
    %c0_i32_107 = arith.constant 0 : i32
    %121 = tpu.memref_slice %arg8[%c5_i32_106, %c0_i32_107] : memref<8x128xf32, #tpu.memory_space<vmem>> -> memref<1x128xf32, #tpu.memory_space<vmem>>
    %122 = tpu.memref_slice %arg10[%c5_i32_104] : memref<8x!tpu.dma_semaphore, #tpu.memory_space<semaphore_mem>> -> memref<1x!tpu.dma_semaphore, #tpu.memory_space<semaphore_mem>>
    %123 = tpu.memref_squeeze %122 : memref<1x!tpu.dma_semaphore, #tpu.memory_space<semaphore_mem>> -> memref<!tpu.dma_semaphore, #tpu.memory_space<semaphore_mem>>
    tpu.wait_dma2 semaphore(%123 : memref<!tpu.dma_semaphore, #tpu.memory_space<semaphore_mem>>) src(%120 : memref<1x128xf32, #tpu.memory_space<any>>) dst(%121 : memref<1x128xf32, #tpu.memory_space<vmem>>)
    %c5_i32_108 = arith.constant 5 : i32
    %c0_i32_109 = arith.constant 0 : i32
    %124 = tpu.memref_slice %arg4[%51, %c0_i32_109] : memref<48x128xf32, #tpu.memory_space<any>> -> memref<1x128xf32, #tpu.memory_space<any>>
    %c5_i32_110 = arith.constant 5 : i32
    %c0_i32_111 = arith.constant 0 : i32
    %125 = tpu.memref_slice %arg9[%c5_i32_110, %c0_i32_111] : memref<8x128xf32, #tpu.memory_space<vmem>> -> memref<1x128xf32, #tpu.memory_space<vmem>>
    %126 = tpu.memref_slice %arg11[%c5_i32_108] : memref<8x!tpu.dma_semaphore, #tpu.memory_space<semaphore_mem>> -> memref<1x!tpu.dma_semaphore, #tpu.memory_space<semaphore_mem>>
    %127 = tpu.memref_squeeze %126 : memref<1x!tpu.dma_semaphore, #tpu.memory_space<semaphore_mem>> -> memref<!tpu.dma_semaphore, #tpu.memory_space<semaphore_mem>>
    tpu.wait_dma2 semaphore(%127 : memref<!tpu.dma_semaphore, #tpu.memory_space<semaphore_mem>>) src(%124 : memref<1x128xf32, #tpu.memory_space<any>>) dst(%125 : memref<1x128xf32, #tpu.memory_space<vmem>>)
    %c6_i32_112 = arith.constant 6 : i32
    %c0_i32_113 = arith.constant 0 : i32
    %128 = tpu.memref_slice %arg3[%60, %c0_i32_113] : memref<48x128xf32, #tpu.memory_space<any>> -> memref<1x128xf32, #tpu.memory_space<any>>
    %c6_i32_114 = arith.constant 6 : i32
    %c0_i32_115 = arith.constant 0 : i32
    %129 = tpu.memref_slice %arg8[%c6_i32_114, %c0_i32_115] : memref<8x128xf32, #tpu.memory_space<vmem>> -> memref<1x128xf32, #tpu.memory_space<vmem>>
    %130 = tpu.memref_slice %arg10[%c6_i32_112] : memref<8x!tpu.dma_semaphore, #tpu.memory_space<semaphore_mem>> -> memref<1x!tpu.dma_semaphore, #tpu.memory_space<semaphore_mem>>
    %131 = tpu.memref_squeeze %130 : memref<1x!tpu.dma_semaphore, #tpu.memory_space<semaphore_mem>> -> memref<!tpu.dma_semaphore, #tpu.memory_space<semaphore_mem>>
    tpu.wait_dma2 semaphore(%131 : memref<!tpu.dma_semaphore, #tpu.memory_space<semaphore_mem>>) src(%128 : memref<1x128xf32, #tpu.memory_space<any>>) dst(%129 : memref<1x128xf32, #tpu.memory_space<vmem>>)
    %c6_i32_116 = arith.constant 6 : i32
    %c0_i32_117 = arith.constant 0 : i32
    %132 = tpu.memref_slice %arg4[%61, %c0_i32_117] : memref<48x128xf32, #tpu.memory_space<any>> -> memref<1x128xf32, #tpu.memory_space<any>>
    %c6_i32_118 = arith.constant 6 : i32
    %c0_i32_119 = arith.constant 0 : i32
    %133 = tpu.memref_slice %arg9[%c6_i32_118, %c0_i32_119] : memref<8x128xf32, #tpu.memory_space<vmem>> -> memref<1x128xf32, #tpu.memory_space<vmem>>
    %134 = tpu.memref_slice %arg11[%c6_i32_116] : memref<8x!tpu.dma_semaphore, #tpu.memory_space<semaphore_mem>> -> memref<1x!tpu.dma_semaphore, #tpu.memory_space<semaphore_mem>>
    %135 = tpu.memref_squeeze %134 : memref<1x!tpu.dma_semaphore, #tpu.memory_space<semaphore_mem>> -> memref<!tpu.dma_semaphore, #tpu.memory_space<semaphore_mem>>
    tpu.wait_dma2 semaphore(%135 : memref<!tpu.dma_semaphore, #tpu.memory_space<semaphore_mem>>) src(%132 : memref<1x128xf32, #tpu.memory_space<any>>) dst(%133 : memref<1x128xf32, #tpu.memory_space<vmem>>)
    %c7_i32_120 = arith.constant 7 : i32
    %c0_i32_121 = arith.constant 0 : i32
    %136 = tpu.memref_slice %arg3[%70, %c0_i32_121] : memref<48x128xf32, #tpu.memory_space<any>> -> memref<1x128xf32, #tpu.memory_space<any>>
    %c7_i32_122 = arith.constant 7 : i32
    %c0_i32_123 = arith.constant 0 : i32
    %137 = tpu.memref_slice %arg8[%c7_i32_122, %c0_i32_123] : memref<8x128xf32, #tpu.memory_space<vmem>> -> memref<1x128xf32, #tpu.memory_space<vmem>>
    %138 = tpu.memref_slice %arg10[%c7_i32_120] : memref<8x!tpu.dma_semaphore, #tpu.memory_space<semaphore_mem>> -> memref<1x!tpu.dma_semaphore, #tpu.memory_space<semaphore_mem>>
    %139 = tpu.memref_squeeze %138 : memref<1x!tpu.dma_semaphore, #tpu.memory_space<semaphore_mem>> -> memref<!tpu.dma_semaphore, #tpu.memory_space<semaphore_mem>>
    tpu.wait_dma2 semaphore(%139 : memref<!tpu.dma_semaphore, #tpu.memory_space<semaphore_mem>>) src(%136 : memref<1x128xf32, #tpu.memory_space<any>>) dst(%137 : memref<1x128xf32, #tpu.memory_space<vmem>>)
    %c7_i32_124 = arith.constant 7 : i32
    %c0_i32_125 = arith.constant 0 : i32
    %140 = tpu.memref_slice %arg4[%71, %c0_i32_125] : memref<48x128xf32, #tpu.memory_space<any>> -> memref<1x128xf32, #tpu.memory_space<any>>
    %c7_i32_126 = arith.constant 7 : i32
    %c0_i32_127 = arith.constant 0 : i32
    %141 = tpu.memref_slice %arg9[%c7_i32_126, %c0_i32_127] : memref<8x128xf32, #tpu.memory_space<vmem>> -> memref<1x128xf32, #tpu.memory_space<vmem>>
    %142 = tpu.memref_slice %arg11[%c7_i32_124] : memref<8x!tpu.dma_semaphore, #tpu.memory_space<semaphore_mem>> -> memref<1x!tpu.dma_semaphore, #tpu.memory_space<semaphore_mem>>
    %143 = tpu.memref_squeeze %142 : memref<1x!tpu.dma_semaphore, #tpu.memory_space<semaphore_mem>> -> memref<!tpu.dma_semaphore, #tpu.memory_space<semaphore_mem>>
    tpu.wait_dma2 semaphore(%143 : memref<!tpu.dma_semaphore, #tpu.memory_space<semaphore_mem>>) src(%140 : memref<1x128xf32, #tpu.memory_space<any>>) dst(%141 : memref<1x128xf32, #tpu.memory_space<vmem>>)
    %c0_128 = arith.constant 0 : index
    %c0_129 = arith.constant 0 : index
    %144 = vector.load %arg8[%c0_128, %c0_129] : memref<8x128xf32, #tpu.memory_space<vmem>>, vector<8x128xf32>
    %c0_130 = arith.constant 0 : index
    %c0_131 = arith.constant 0 : index
    %145 = vector.load %arg9[%c0_130, %c0_131] : memref<8x128xf32, #tpu.memory_space<vmem>>, vector<8x128xf32>
    %146 = arith.mulf %144, %145 : vector<8x128xf32>
    %c0_132 = arith.constant 0 : index
    %c0_133 = arith.constant 0 : index
    %147 = vector.load %arg5[%c0_132, %c0_133] : memref<1x128xf32, #tpu.memory_space<vmem>>, vector<1x128xf32>
    %148 = vector.broadcast %147 : vector<1x128xf32> to vector<8x128xf32>
    %149 = arith.mulf %146, %148 : vector<8x128xf32>
    %cst = arith.constant dense<0.000000e+00> : vector<8xf32>
    %150 = vector.multi_reduction <add>, %149, %cst [1] : vector<8x128xf32> to vector<8xf32>
    %c0_134 = arith.constant 0 : index
    %151 = memref.load %arg6[%c0_134] : memref<1xf32, #tpu.memory_space<smem>>
    %152 = vector.broadcast %151 : f32 to vector<8xf32>
    %153 = arith.addf %150, %152 : vector<8xf32>
    %154 = arith.negf %153 : vector<8xf32>
    %155 = math.exp %154 : vector<8xf32>
    %cst_135 = arith.constant 1.000000e+00 : f32
    %156 = vector.broadcast %cst_135 : f32 to vector<8xf32>
    %157 = arith.addf %156, %155 : vector<8xf32>
    %158 = arith.divf %156, %157 : vector<8xf32>
    %159 = vector.shape_cast %158 : vector<8xf32> to vector<1x8xf32>
    %c0_136 = arith.constant 0 : index
    %c0_137 = arith.constant 0 : index
    %160 = vector.load %arg7[%c0_136, %c0_137] : memref<1x8xf32, #tpu.memory_space<vmem>>, vector<1x8xf32>
    tpu.vector_store %arg7[%c0_136, %c0_137], %159 {strides = array<i32>} : memref<1x8xf32, #tpu.memory_space<vmem>>, vector<1x8xf32>,
    return
  }
  func.func @transform_2(%arg0: i32, %arg1: memref<8xi32, #tpu.memory_space<smem>>, %arg2: memref<8xi32, #tpu.memory_space<smem>>) -> (i32, i32) {
    %c0_i32 = arith.constant 0 : i32
    %c0_i32_0 = arith.constant 0 : i32
    %c0_i32_1 = arith.constant 0 : i32
    return %c0_i32, %c0_i32_0 : i32, i32
  }
  func.func @transform_3(%arg0: i32, %arg1: memref<8xi32, #tpu.memory_space<smem>>, %arg2: memref<8xi32, #tpu.memory_space<smem>>) -> i32 {
    %c0_i32 = arith.constant 0 : i32
    %c0_i32_0 = arith.constant 0 : i32
    return %c0_i32 : i32
  }
  func.func @transform_4(%arg0: i32, %arg1: memref<8xi32, #tpu.memory_space<smem>>, %arg2: memref<8xi32, #tpu.memory_space<smem>>) -> (i32, i32) {
    %c0_i32 = arith.constant 0 : i32
    %c0_i32_0 = arith.constant 0 : i32
    %c0_i32_1 = arith.constant 0 : i32
    return %c0_i32, %c0_i32_0 : i32, i32
  }
}

</mosaic_0001>

<llo_original>
// kernel: tpu_custom_call.1
$region0: #{tpu_custom_call.1}
  #allocation0 [shape = 'u32[]', space=smem, size = 0x4, offset = 0x4, fixed_abs, tag = 'smem constant byte address 0x4 - core index']
  #allocation1 [shape = 'u32[144,128]{1,0:T(1,128)}', space=vmem, size = 0x12000, scoped, tag = 'internal scratch']
  #allocation2 [shape = 'f32[8,128]{1,0:T(8,128)}', space=vmem, size = 0x1000, scoped, tag = 'scratch operand']
  #allocation3 [shape = 'f32[8,128]{1,0:T(8,128)}', space=vmem, size = 0x1000, scoped, tag = 'scratch operand']
  #allocation4 [shape = 's32[8]{0}', space=sflag, size = 0x20, scoped, tag = 'scratch operand']
  #allocation5 [shape = 's32[8]{0}', space=sflag, size = 0x20, scoped, tag = 'scratch operand']
  #allocation6 [shape = 's32[1]{0}', space=sflag, size = 0x4, scoped, tag = 'scoped memory for tpu_custom_call.1']
  #allocation7 [shape = 'u8[512]{0}', space=smem, size = 0x200, scoped, tag = 'prefetched SMEM operand 0']
  #allocation8 [shape = 'u8[512]{0}', space=smem, size = 0x200, scoped, tag = 'prefetched SMEM operand 1']
  #allocation9 [shape = 'f32[1]{0:T(128)S(6)}', space=smem, size = 0x200, scoped, tag = 'scoped memory for tpu_custom_call.1']
  #allocation12 [shape = 's32[]', space=sflag, size = 0x4, offset = 0, fixed_abs, tag = 'sflag constant byte address 0x0 - dummy sync flag']
  #allocation13 [shape = 's32[]', space=sflag, size = 0x4, offset = 0, fixed_abs, tag = 'sflag constant byte address 0x0 - dummy sync flag']
  #allocation14 [shape = 'u32[]', space=smem, size = 0x4, offset = 0x44, fixed_abs, tag = 'smem constant byte address 0x44 - assertion arg 0']
  #allocation15 [shape = 'u32[]', space=smem, size = 0x4, offset = 0x48, fixed_abs, tag = 'smem constant byte address 0x48 - assertion arg 1']
  #allocation16 [shape = 's32[]', space=sflag, size = 0x4, offset = 0, fixed_abs, tag = 'sflag constant byte address 0x0 - dummy sync flag']
  #allocation17 [shape = 's32[]', space=sflag, size = 0x4, offset = 0, fixed_abs, tag = 'sflag constant byte address 0x0 - dummy sync flag']
  #allocation18 [shape = 's32[]', space=sflag, size = 0x4, offset = 0, fixed_abs, tag = 'sflag constant byte address 0x0 - dummy sync flag']
  #allocation19 [shape = 's32[]', space=sflag, size = 0x4, offset = 0, fixed_abs, tag = 'sflag constant byte address 0x0 - dummy sync flag']
  #allocation20 [shape = 's32[]', space=sflag, size = 0x4, offset = 0, fixed_abs, tag = 'sflag constant byte address 0x0 - dummy sync flag']
  #allocation21 [shape = 's32[]', space=sflag, size = 0x4, offset = 0, fixed_abs, tag = 'sflag constant byte address 0x0 - dummy sync flag']
  #allocation22 [shape = 's32[]', space=sflag, size = 0x4, offset = 0, fixed_abs, tag = 'sflag constant byte address 0x0 - dummy sync flag']
  #allocation23 [shape = 's32[]', space=sflag, size = 0x4, offset = 0, fixed_abs, tag = 'sflag constant byte address 0x0 - dummy sync flag']
  #allocation24 [shape = 's32[]', space=sflag, size = 0x4, offset = 0, fixed_abs, tag = 'sflag constant byte address 0x0 - dummy sync flag']
  #allocation25 [shape = 's32[]', space=sflag, size = 0x4, offset = 0, fixed_abs, tag = 'sflag constant byte address 0x0 - dummy sync flag']
  #allocation26 [shape = 's32[]', space=sflag, size = 0x4, offset = 0, fixed_abs, tag = 'sflag constant byte address 0x0 - dummy sync flag']
  #allocation27 [shape = 's32[]', space=sflag, size = 0x4, offset = 0, fixed_abs, tag = 'sflag constant byte address 0x0 - dummy sync flag']
  #allocation28 [shape = 's32[]', space=sflag, size = 0x4, offset = 0, fixed_abs, tag = 'sflag constant byte address 0x0 - dummy sync flag']
  #allocation29 [shape = 's32[]', space=sflag, size = 0x4, offset = 0, fixed_abs, tag = 'sflag constant byte address 0x0 - dummy sync flag']
  #allocation30 [shape = 's32[]', space=sflag, size = 0x4, offset = 0, fixed_abs, tag = 'sflag constant byte address 0x0 - dummy sync flag']
  #allocation31 [shape = 's32[]', space=sflag, size = 0x4, offset = 0, fixed_abs, tag = 'sflag constant byte address 0x0 - dummy sync flag']
  #allocation32 [shape = 's32[]', space=sflag, size = 0x4, offset = 0, fixed_abs, tag = 'sflag constant byte address 0x0 - dummy sync flag']
  #allocation33 [shape = 's32[]', space=sflag, size = 0x4, offset = 0, fixed_abs, tag = 'sflag constant byte address 0x0 - dummy sync flag']
  #allocation34 [shape = 's32[]', space=sflag, size = 0x4, offset = 0, fixed_abs, tag = 'sflag constant byte address 0x0 - dummy sync flag']
  #allocation35 [shape = 's32[]', space=sflag, size = 0x4, offset = 0, fixed_abs, tag = 'sflag constant byte address 0x0 - dummy sync flag']
  #allocation36 [shape = 's32[]', space=sflag, size = 0x4, offset = 0, fixed_abs, tag = 'sflag constant byte address 0x0 - dummy sync flag']
  #allocation37 [shape = 's32[]', space=sflag, size = 0x4, offset = 0, fixed_abs, tag = 'sflag constant byte address 0x0 - dummy sync flag']
  #allocation38 [shape = 's32[]', space=sflag, size = 0x4, offset = 0, fixed_abs, tag = 'sflag constant byte address 0x0 - dummy sync flag']
  #allocation39 [shape = 's32[]', space=sflag, size = 0x4, offset = 0, fixed_abs, tag = 'sflag constant byte address 0x0 - dummy sync flag']
  #allocation40 [shape = 's32[]', space=sflag, size = 0x4, offset = 0, fixed_abs, tag = 'sflag constant byte address 0x0 - dummy sync flag']
  #allocation41 [shape = 's32[]', space=sflag, size = 0x4, offset = 0, fixed_abs, tag = 'sflag constant byte address 0x0 - dummy sync flag']
  #allocation42 [shape = 's32[]', space=sflag, size = 0x4, offset = 0, fixed_abs, tag = 'sflag constant byte address 0x0 - dummy sync flag']
  #allocation43 [shape = 's32[]', space=sflag, size = 0x4, offset = 0, fixed_abs, tag = 'sflag constant byte address 0x0 - dummy sync flag']
  #allocation44 [shape = 's32[]', space=sflag, size = 0x4, offset = 0, fixed_abs, tag = 'sflag constant byte address 0x0 - dummy sync flag']
  #allocation45 [shape = 's32[]', space=sflag, size = 0x4, offset = 0, fixed_abs, tag = 'sflag constant byte address 0x0 - dummy sync flag']
  %s0 = inlined_call_operand.vmem [shape: s32[8], index: 0, kind: input, shape index: {}]
  %s1 = inlined_call_operand.vmem [shape: s32[8], index: 1, kind: input, shape index: {}]
  %s2 = inlined_call_operand.hbm [shape: f32[48,128], index: 2, kind: input, shape index: {}]
  %s3 = inlined_call_operand.hbm [shape: f32[48,128], index: 3, kind: input, shape index: {}]
  %s4 = inlined_call_operand.vmem [shape: f32[1,128], index: 4, kind: input, shape index: {}]
  %s5 = inlined_call_operand.<no memory space> [shape: f32[1], index: 5, kind: input, shape index: {}]
  %s6 = inlined_call_operand.hbm [shape: f32[1,8], index: 6, kind: output, shape index: {}]
  %s7 = sld [smem:[#allocation0]]
  $region82: #{tpu_custom_call.1} parent=0
    _
  %s9 = ssub.s32 1, %s7
  %s10 = scalar_select 0, %s9, %s7
  %s11 = sshll.u32 %s0, 4
  %s12 = int_to_ptr.vmem [resolvable:$true] %s11
  %14 = dma.vmem_to_smem %s12, 16, [#allocation7], [#allocation6]
  %s15 = sshll.u32 %s1, 4
  %s16 = int_to_ptr.vmem [resolvable:$true] %s15
  %18 = dma.vmem_to_smem %s16, 16, [#allocation8], [#allocation6]
  %19 = sst [smem:[#allocation9]] %s5
  %20 = dma.done [#allocation6], 32
  %21 = sfence
  $region1: #{tpu_custom_call.1} parent=0
    #allocation10 [shape = 'u8[512]{0}', space=vmem, size = 0x400, scoped, tag = 'output window, operand 0, single buffered']
    #allocation11 [shape = 's32[1]{0}', space=sflag, size = 0x4, scoped, tag = 'scoped memory for tpu_custom_call.1']
    %22 = vsyncpa [#allocation11], 0
    // Predicated region
    $region2: #{tpu_custom_call.1} parent=1 // pred_check
      _
    $region3: #{tpu_custom_call.1} parent=1 // pred_check_branch
      %24 = sbr.rel (0) target = $region5
    $region4: #{tpu_custom_call.1} parent=1 // pred_region
      _
    $region5: #{tpu_custom_call.1} parent=1 // pred_fallthru
      _
    // Predicated region
    $region6: #{tpu_custom_call.1} parent=1 // pred_check
      _
    $region7: #{tpu_custom_call.1} parent=1 // pred_check_branch
      %26 = sbr.rel (0) target = $region9
    $region8: #{tpu_custom_call.1} parent=1 // pred_region
      _
    $region9: #{tpu_custom_call.1} parent=1 // pred_fallthru
      _
    %s27 = sld [smem:[#allocation7]]
    %s28 = sld [smem:[#allocation8]]
    %s29 = smul.addr %s27, 16
    %s30 = scalar_lea.hbm %s2, %s29
    // Predicated region
    $region10: #{tpu_custom_call.1} parent=1 // pred_check
      _
    $region11: #{tpu_custom_call.1} parent=1 // pred_check_branch
      %32 = sbr.rel target = $region13
    $region12: #{tpu_custom_call.1} parent=1 // pred_region
      %33 = sst [smem:[#allocation14]] [#allocation13]
      %34 = sst [smem:[#allocation15]] [#allocation12]
    $region13: #{tpu_custom_call.1} parent=1 // pred_fallthru
      _
    %36 = shalt.err (0)
    %s38 = sshll.u32 [#allocation2], 4
    %s39 = int_to_ptr.vmem [resolvable:$true] %s38
    %41 = dma.hbm_to_vmem [thread:$0]  %s30, 16, %s39, [#allocation4]
    %s42 = smul.addr %s28, 16
    %s43 = scalar_lea.hbm %s3, %s42
    // Predicated region
    $region14: #{tpu_custom_call.1} parent=1 // pred_check
      _
    $region15: #{tpu_custom_call.1} parent=1 // pred_check_branch
      %45 = sbr.rel target = $region17
    $region16: #{tpu_custom_call.1} parent=1 // pred_region
      %46 = sst [smem:[#allocation14]] [#allocation17]
      %47 = sst [smem:[#allocation15]] [#allocation16]
    $region17: #{tpu_custom_call.1} parent=1 // pred_fallthru
      _
    %49 = shalt.err (0)
    %s51 = sshll.u32 [#allocation3], 4
    %s52 = int_to_ptr.vmem [resolvable:$true] %s51
    %54 = dma.hbm_to_vmem [thread:$0]  %s43, 16, %s52, [#allocation5]
    %s55 = sld [smem:[#allocation7 + $0x1]]
    %s56 = sld [smem:[#allocation8 + $0x1]]
    %s57 = smul.addr %s55, 16
    %s58 = scalar_lea.hbm %s2, %s57
    %s59 = scalar_lea.vmem [#allocation2], 1
    %s60 = scalar_lea.sflag [#allocation4], 1
    // Predicated region
    $region18: #{tpu_custom_call.1} parent=1 // pred_check
      _
    $region19: #{tpu_custom_call.1} parent=1 // pred_check_branch
      %62 = sbr.rel target = $region21
    $region20: #{tpu_custom_call.1} parent=1 // pred_region
      %63 = sst [smem:[#allocation14]] [#allocation19]
      %64 = sst [smem:[#allocation15]] [#allocation18]
    $region21: #{tpu_custom_call.1} parent=1 // pred_fallthru
      _
    %66 = shalt.err (0)
    %s68 = sshll.u32 %s59, 4
    %s69 = int_to_ptr.vmem [resolvable:$true] %s68
    %71 = dma.hbm_to_vmem [thread:$0]  %s58, 16, %s69, %s60
    %s72 = smul.addr %s56, 16
    %s73 = scalar_lea.hbm %s3, %s72
    %s74 = scalar_lea.vmem [#allocation3], 1
    %s75 = scalar_lea.sflag [#allocation5], 1
    // Predicated region
    $region22: #{tpu_custom_call.1} parent=1 // pred_check
      _
    $region23: #{tpu_custom_call.1} parent=1 // pred_check_branch
      %77 = sbr.rel target = $region25
    $region24: #{tpu_custom_call.1} parent=1 // pred_region
      %78 = sst [smem:[#allocation14]] [#allocation21]
      %79 = sst [smem:[#allocation15]] [#allocation20]
    $region25: #{tpu_custom_call.1} parent=1 // pred_fallthru
      _
    %81 = shalt.err (0)
    %s83 = sshll.u32 %s74, 4
    %s84 = int_to_ptr.vmem [resolvable:$true] %s83
    %86 = dma.hbm_to_vmem [thread:$0]  %s73, 16, %s84, %s75
    %s87 = sld [smem:[#allocation7 + $0x2]]
    %s88 = sld [smem:[#allocation8 + $0x2]]
    %s89 = smul.addr %s87, 16
    %s90 = scalar_lea.hbm %s2, %s89
    %s91 = scalar_lea.vmem [#allocation2], 2
    %s92 = scalar_lea.sflag [#allocation4], 2
    // Predicated region
    $region26: #{tpu_custom_call.1} parent=1 // pred_check
      _
    $region27: #{tpu_custom_call.1} parent=1 // pred_check_branch
      %94 = sbr.rel target = $region29
    $region28: #{tpu_custom_call.1} parent=1 // pred_region
      %95 = sst [smem:[#allocation14]] [#allocation23]
      %96 = sst [smem:[#allocation15]] [#allocation22]
    $region29: #{tpu_custom_call.1} parent=1 // pred_fallthru
      _
    %98 = shalt.err (0)
    %s100 = sshll.u32 %s91, 4
    %s101 = int_to_ptr.vmem [resolvable:$true] %s100
    %103 = dma.hbm_to_vmem [thread:$0]  %s90, 16, %s101, %s92
    %s104 = smul.addr %s88, 16
    %s105 = scalar_lea.hbm %s3, %s104
    %s106 = scalar_lea.vmem [#allocation3], 2
    %s107 = scalar_lea.sflag [#allocation5], 2
    // Predicated region
    $region30: #{tpu_custom_call.1} parent=1 // pred_check
      _
    $region31: #{tpu_custom_call.1} parent=1 // pred_check_branch
      %109 = sbr.rel target = $region33
    $region32: #{tpu_custom_call.1} parent=1 // pred_region
      %110 = sst [smem:[#allocation14]] [#allocation25]
      %111 = sst [smem:[#allocation15]] [#allocation24]
    $region33: #{tpu_custom_call.1} parent=1 // pred_fallthru
      _
    %113 = shalt.err (0)
    %s115 = sshll.u32 %s106, 4
    %s116 = int_to_ptr.vmem [resolvable:$true] %s115
    %118 = dma.hbm_to_vmem [thread:$0]  %s105, 16, %s116, %s107
    %s119 = sld [smem:[#allocation7 + $0x3]]
    %s120 = sld [smem:[#allocation8 + $0x3]]
    %s121 = smul.addr %s119, 16
    %s122 = scalar_lea.hbm %s2, %s121
    %s123 = scalar_lea.vmem [#allocation2], 3
    %s124 = scalar_lea.sflag [#allocation4], 3
    // Predicated region
    $region34: #{tpu_custom_call.1} parent=1 // pred_check
      _
    $region35: #{tpu_custom_call.1} parent=1 // pred_check_branch
      %126 = sbr.rel target = $region37
    $region36: #{tpu_custom_call.1} parent=1 // pred_region
      %127 = sst [smem:[#allocation14]] [#allocation27]
      %128 = sst [smem:[#allocation15]] [#allocation26]
    $region37: #{tpu_custom_call.1} parent=1 // pred_fallthru
      _
    %130 = shalt.err (0)
    %s132 = sshll.u32 %s123, 4
    %s133 = int_to_ptr.vmem [resolvable:$true] %s132
    %135 = dma.hbm_to_vmem [thread:$0]  %s122, 16, %s133, %s124
    %s136 = smul.addr %s120, 16
    %s137 = scalar_lea.hbm %s3, %s136
    %s138 = scalar_lea.vmem [#allocation3], 3
    %s139 = scalar_lea.sflag [#allocation5], 3
    // Predicated region
    $region38: #{tpu_custom_call.1} parent=1 // pred_check
      _
    $region39: #{tpu_custom_call.1} parent=1 // pred_check_branch
      %141 = sbr.rel target = $region41
    $region40: #{tpu_custom_call.1} parent=1 // pred_region
      %142 = sst [smem:[#allocation14]] [#allocation29]
      %143 = sst [smem:[#allocation15]] [#allocation28]
    $region41: #{tpu_custom_call.1} parent=1 // pred_fallthru
      _
    %145 = shalt.err (0)
    %s147 = sshll.u32 %s138, 4
    %s148 = int_to_ptr.vmem [resolvable:$true] %s147
    %150 = dma.hbm_to_vmem [thread:$0]  %s137, 16, %s148, %s139
    %s151 = sld [smem:[#allocation7 + $0x4]]
    %s152 = sld [smem:[#allocation8 + $0x4]]
    %s153 = smul.addr %s151, 16
    %s154 = scalar_lea.hbm %s2, %s153
    %s155 = scalar_lea.vmem [#allocation2], 4
    %s156 = scalar_lea.sflag [#allocation4], 4
    // Predicated region
    $region42: #{tpu_custom_call.1} parent=1 // pred_check
      _
    $region43: #{tpu_custom_call.1} parent=1 // pred_check_branch
      %158 = sbr.rel target = $region45
    $region44: #{tpu_custom_call.1} parent=1 // pred_region
      %159 = sst [smem:[#allocation14]] [#allocation31]
      %160 = sst [smem:[#allocation15]] [#allocation30]
    $region45: #{tpu_custom_call.1} parent=1 // pred_fallthru
      _
    %162 = shalt.err (0)
    %s164 = sshll.u32 %s155, 4
    %s165 = int_to_ptr.vmem [resolvable:$true] %s164
    %167 = dma.hbm_to_vmem [thread:$0]  %s154, 16, %s165, %s156
    %s168 = smul.addr %s152, 16
    %s169 = scalar_lea.hbm %s3, %s168
    %s170 = scalar_lea.vmem [#allocation3], 4
    %s171 = scalar_lea.sflag [#allocation5], 4
    // Predicated region
    $region46: #{tpu_custom_call.1} parent=1 // pred_check
      _
    $region47: #{tpu_custom_call.1} parent=1 // pred_check_branch
      %173 = sbr.rel target = $region49
    $region48: #{tpu_custom_call.1} parent=1 // pred_region
      %174 = sst [smem:[#allocation14]] [#allocation33]
      %175 = sst [smem:[#allocation15]] [#allocation32]
    $region49: #{tpu_custom_call.1} parent=1 // pred_fallthru
      _
    %177 = shalt.err (0)
    %s179 = sshll.u32 %s170, 4
    %s180 = int_to_ptr.vmem [resolvable:$true] %s179
    %182 = dma.hbm_to_vmem [thread:$0]  %s169, 16, %s180, %s171
    %s183 = sld [smem:[#allocation7 + $0x5]]
    %s184 = sld [smem:[#allocation8 + $0x5]]
    %s185 = smul.addr %s183, 16
    %s186 = scalar_lea.hbm %s2, %s185
    %s187 = scalar_lea.vmem [#allocation2], 5
    %s188 = scalar_lea.sflag [#allocation4], 5
    // Predicated region
    $region50: #{tpu_custom_call.1} parent=1 // pred_check
      _
    $region51: #{tpu_custom_call.1} parent=1 // pred_check_branch
      %190 = sbr.rel target = $region53
    $region52: #{tpu_custom_call.1} parent=1 // pred_region
      %191 = sst [smem:[#allocation14]] [#allocation35]
      %192 = sst [smem:[#allocation15]] [#allocation34]
    $region53: #{tpu_custom_call.1} parent=1 // pred_fallthru
      _
    %194 = shalt.err (0)
    %s196 = sshll.u32 %s187, 4
    %s197 = int_to_ptr.vmem [resolvable:$true] %s196
    %199 = dma.hbm_to_vmem [thread:$0]  %s186, 16, %s197, %s188
    %s200 = smul.addr %s184, 16
    %s201 = scalar_lea.hbm %s3, %s200
    %s202 = scalar_lea.vmem [#allocation3], 5
    %s203 = scalar_lea.sflag [#allocation5], 5
    // Predicated region
    $region54: #{tpu_custom_call.1} parent=1 // pred_check
      _
    $region55: #{tpu_custom_call.1} parent=1 // pred_check_branch
      %205 = sbr.rel target = $region57
    $region56: #{tpu_custom_call.1} parent=1 // pred_region
      %206 = sst [smem:[#allocation14]] [#allocation37]
      %207 = sst [smem:[#allocation15]] [#allocation36]
    $region57: #{tpu_custom_call.1} parent=1 // pred_fallthru
      _
    %209 = shalt.err (0)
    %s211 = sshll.u32 %s202, 4
    %s212 = int_to_ptr.vmem [resolvable:$true] %s211
    %214 = dma.hbm_to_vmem [thread:$0]  %s201, 16, %s212, %s203
    %s215 = sld [smem:[#allocation7 + $0x6]]
    %s216 = sld [smem:[#allocation8 + $0x6]]
    %s217 = smul.addr %s215, 16
    %s218 = scalar_lea.hbm %s2, %s217
    %s219 = scalar_lea.vmem [#allocation2], 6
    %s220 = scalar_lea.sflag [#allocation4], 6
    // Predicated region
    $region58: #{tpu_custom_call.1} parent=1 // pred_check
      _
    $region59: #{tpu_custom_call.1} parent=1 // pred_check_branch
      %222 = sbr.rel target = $region61
    $region60: #{tpu_custom_call.1} parent=1 // pred_region
      %223 = sst [smem:[#allocation14]] [#allocation39]
      %224 = sst [smem:[#allocation15]] [#allocation38]
    $region61: #{tpu_custom_call.1} parent=1 // pred_fallthru
      _
    %226 = shalt.err (0)
    %s228 = sshll.u32 %s219, 4
    %s229 = int_to_ptr.vmem [resolvable:$true] %s228
    %231 = dma.hbm_to_vmem [thread:$0]  %s218, 16, %s229, %s220
    %s232 = smul.addr %s216, 16
    %s233 = scalar_lea.hbm %s3, %s232
    %s234 = scalar_lea.vmem [#allocation3], 6
    %s235 = scalar_lea.sflag [#allocation5], 6
    // Predicated region
    $region62: #{tpu_custom_call.1} parent=1 // pred_check
      _
    $region63: #{tpu_custom_call.1} parent=1 // pred_check_branch
      %237 = sbr.rel target = $region65
    $region64: #{tpu_custom_call.1} parent=1 // pred_region
      %238 = sst [smem:[#allocation14]] [#allocation41]
      %239 = sst [smem:[#allocation15]] [#allocation40]
    $region65: #{tpu_custom_call.1} parent=1 // pred_fallthru
      _
    %241 = shalt.err (0)
    %s243 = sshll.u32 %s234, 4
    %s244 = int_to_ptr.vmem [resolvable:$true] %s243
    %246 = dma.hbm_to_vmem [thread:$0]  %s233, 16, %s244, %s235
    %s247 = sld [smem:[#allocation7 + $0x7]]
    %s248 = sld [smem:[#allocation8 + $0x7]]
    %s249 = smul.addr %s247, 16
    %s250 = scalar_lea.hbm %s2, %s249
    %s251 = scalar_lea.vmem [#allocation2], 7
    %s252 = scalar_lea.sflag [#allocation4], 7
    // Predicated region
    $region66: #{tpu_custom_call.1} parent=1 // pred_check
      _
    $region67: #{tpu_custom_call.1} parent=1 // pred_check_branch
      %254 = sbr.rel target = $region69
    $region68: #{tpu_custom_call.1} parent=1 // pred_region
      %255 = sst [smem:[#allocation14]] [#allocation43]
      %256 = sst [smem:[#allocation15]] [#allocation42]
    $region69: #{tpu_custom_call.1} parent=1 // pred_fallthru
      _
    %258 = shalt.err (0)
    %s260 = sshll.u32 %s251, 4
    %s261 = int_to_ptr.vmem [resolvable:$true] %s260
    %263 = dma.hbm_to_vmem [thread:$0]  %s250, 16, %s261, %s252
    %s264 = smul.addr %s248, 16
    %s265 = scalar_lea.hbm %s3, %s264
    %s266 = scalar_lea.vmem [#allocation3], 7
    %s267 = scalar_lea.sflag [#allocation5], 7
    // Predicated region
    $region70: #{tpu_custom_call.1} parent=1 // pred_check
      _
    $region71: #{tpu_custom_call.1} parent=1 // pred_check_branch
      %269 = sbr.rel target = $region73
    $region72: #{tpu_custom_call.1} parent=1 // pred_region
      %270 = sst [smem:[#allocation14]] [#allocation45]
      %271 = sst [smem:[#allocation15]] [#allocation44]
    $region73: #{tpu_custom_call.1} parent=1 // pred_fallthru
      _
    %273 = shalt.err (0)
    %s275 = sshll.u32 %s266, 4
    %s276 = int_to_ptr.vmem [resolvable:$true] %s275
    %278 = dma.hbm_to_vmem [thread:$0]  %s265, 16, %s276, %s267
    %s279 = smul.u32 1, 1
    %s280 = sshll.u32 %s279, 4
    %281 = dma.done [#allocation4], %s280
    %s282 = sshll.u32 %s279, 4
    %283 = dma.done [#allocation5], %s282
    %s284 = sshll.u32 %s279, 4
    %285 = dma.done %s60, %s284
    %s286 = sshll.u32 %s279, 4
    %287 = dma.done %s75, %s286
    %s288 = sshll.u32 %s279, 4
    %289 = dma.done %s92, %s288
    %s290 = sshll.u32 %s279, 4
    %291 = dma.done %s107, %s290
    %s292 = sshll.u32 %s279, 4
    %293 = dma.done %s124, %s292
    %s294 = sshll.u32 %s279, 4
    %295 = dma.done %s139, %s294
    %s296 = sshll.u32 %s279, 4
    %297 = dma.done %s156, %s296
    %s298 = sshll.u32 %s279, 4
    %299 = dma.done %s171, %s298
    %s300 = sshll.u32 %s279, 4
    %301 = dma.done %s188, %s300
    %s302 = sshll.u32 %s279, 4
    %303 = dma.done %s203, %s302
    %s304 = sshll.u32 %s279, 4
    %305 = dma.done %s220, %s304
    %s306 = sshll.u32 %s279, 4
    %307 = dma.done %s235, %s306
    %s308 = sshll.u32 %s279, 4
    %309 = dma.done %s252, %s308
    %s310 = sshll.u32 %s279, 4
    %311 = dma.done %s267, %s310
    %v312 = vld [vmem:[#allocation2] sm:$0xff]
    %v313 = vld [vmem:[#allocation3] sm:$0xff]
    %v314 = vmul.f32 %v312, %v313
    %v315 = vld [vmem:[%s4] sm:$0x1]
    %v317 = vlaneseq
    %v318 = vshrl.u32 %v317, 7
    %v319 = vsub.s32 0, %v318
    %v320 = vrot.slane %v315, %v319
    %v322 = vmul.f32 %v314, %v320
    %323 = vadd.xlane.f32.xlu0 %v322
    %v324 = vpop.xlane.xlu0 %323
    %s325 = sld [smem:[#allocation9]]
    %v326 = vstv %s325
    %v327 = vadd.f32 %v324, %v326
    %v328 = vxor.u32 %v327, 2147483648
    %v329 = vmul.f32 %v328, 1.442695
    %v330 = vpow.pop %v329
    %v331 = vadd.f32 %v330, 1.0
    %v332 = vrcp.pop %v331
    %v333 = vmul.f32 1.0, %v332
    %v335 = vlaneseq
    %v336 = vand.u32 %v335, 127
    %v337 = vlaneseq
    %v338 = vshrl.u32 %v337, 7
    %v339 = vsub.s32 %v336, %v338
    %v340 = vrot.slane %v333, %v339
    %vm342 = vcmask 57344
    %343 = vst.msk [vmem:[#allocation10] sm:$0x1] %vm342, %v340
    // Predicated region
    $region74: #{tpu_custom_call.1} parent=1 // pred_check
      _
    $region75: #{tpu_custom_call.1} parent=1 // pred_check_branch
      %345 = sbr.rel (0) target = $region77
    $region76: #{tpu_custom_call.1} parent=1 // pred_region
      %s347 = ssub.s32 16, 16
      %348 = vsyncadd [#allocation11], %s347
      %s350 = sshll.u32 [#allocation10], 4
      %s351 = int_to_ptr.vmem [resolvable:$true] %s350
      %353 = dma.vmem_to_hbm [thread:$0]  %s351, 16, %s6, [#allocation11]
    $region77: #{tpu_custom_call.1} parent=1 // pred_fallthru
      _
    // Predicated region
    $region78: #{tpu_custom_call.1} parent=1 // pred_check
      _
    $region79: #{tpu_custom_call.1} parent=1 // pred_check_branch
      %355 = sbr.rel (0) target = $region81
    $region80: #{tpu_custom_call.1} parent=1 // pred_region
      %356 = dma.done [#allocation11], 16
    $region81: #{tpu_custom_call.1} parent=1 // pred_fallthru
      _
    %357 = vsyncpa [#allocation11], 1
  %358 = vsyncmov [#allocation4]
  %s359 = vpop.sfrf %358
  %p360 = scmp.eq.s32.totalorder %s359, 0
  %p361 = pneg %p360
  %363 = shalt.err (%p361)
  %s364 = scalar_lea.sflag [#allocation4], 1
  %365 = vsyncmov %s364
  %s366 = vpop.sfrf %365
  %p367 = scmp.eq.s32.totalorder %s366, 0
  %p368 = pneg %p367
  %370 = shalt.err (%p368)
  %s371 = scalar_lea.sflag [#allocation4], 2
  %372 = vsyncmov %s371
  %s373 = vpop.sfrf %372
  %p374 = scmp.eq.s32.totalorder %s373, 0
  %p375 = pneg %p374
  %377 = shalt.err (%p375)
  %s378 = scalar_lea.sflag [#allocation4], 3
  %379 = vsyncmov %s378
  %s380 = vpop.sfrf %379
  %p381 = scmp.eq.s32.totalorder %s380, 0
  %p382 = pneg %p381
  %384 = shalt.err (%p382)
  %s385 = scalar_lea.sflag [#allocation4], 4
  %386 = vsyncmov %s385
  %s387 = vpop.sfrf %386
  %p388 = scmp.eq.s32.totalorder %s387, 0
  %p389 = pneg %p388
  %391 = shalt.err (%p389)
  %s392 = scalar_lea.sflag [#allocation4], 5
  %393 = vsyncmov %s392
  %s394 = vpop.sfrf %393
  %p395 = scmp.eq.s32.totalorder %s394, 0
  %p396 = pneg %p395
  %398 = shalt.err (%p396)
  %s399 = scalar_lea.sflag [#allocation4], 6
  %400 = vsyncmov %s399
  %s401 = vpop.sfrf %400
  %p402 = scmp.eq.s32.totalorder %s401, 0
  %p403 = pneg %p402
  %405 = shalt.err (%p403)
  %s406 = scalar_lea.sflag [#allocation4], 7
  %407 = vsyncmov %s406
  %s408 = vpop.sfrf %407
  %p409 = scmp.eq.s32.totalorder %s408, 0
  %p410 = pneg %p409
  %412 = shalt.err (%p410)
  %413 = vsyncmov [#allocation5]
  %s414 = vpop.sfrf %413
  %p415 = scmp.eq.s32.totalorder %s414, 0
  %p416 = pneg %p415
  %418 = shalt.err (%p416)
  %s419 = scalar_lea.sflag [#allocation5], 1
  %420 = vsyncmov %s419
  %s421 = vpop.sfrf %420
  %p422 = scmp.eq.s32.totalorder %s421, 0
  %p423 = pneg %p422
  %425 = shalt.err (%p423)
  %s426 = scalar_lea.sflag [#allocation5], 2
  %427 = vsyncmov %s426
  %s428 = vpop.sfrf %427
  %p429 = scmp.eq.s32.totalorder %s428, 0
  %p430 = pneg %p429
  %432 = shalt.err (%p430)
  %s433 = scalar_lea.sflag [#allocation5], 3
  %434 = vsyncmov %s433
  %s435 = vpop.sfrf %434
  %p436 = scmp.eq.s32.totalorder %s435, 0
  %p437 = pneg %p436
  %439 = shalt.err (%p437)
  %s440 = scalar_lea.sflag [#allocation5], 4
  %441 = vsyncmov %s440
  %s442 = vpop.sfrf %441
  %p443 = scmp.eq.s32.totalorder %s442, 0
  %p444 = pneg %p443
  %446 = shalt.err (%p444)
  %s447 = scalar_lea.sflag [#allocation5], 5
  %448 = vsyncmov %s447
  %s449 = vpop.sfrf %448
  %p450 = scmp.eq.s32.totalorder %s449, 0
  %p451 = pneg %p450
  %453 = shalt.err (%p451)
  %s454 = scalar_lea.sflag [#allocation5], 6
  %455 = vsyncmov %s454
  %s456 = vpop.sfrf %455
  %p457 = scmp.eq.s32.totalorder %s456, 0
  %p458 = pneg %p457
  %460 = shalt.err (%p458)
  %s461 = scalar_lea.sflag [#allocation5], 7
  %462 = vsyncmov %s461
  %s463 = vpop.sfrf %462
  %p464 = scmp.eq.s32.totalorder %s463, 0
  %p465 = pneg %p464
  %467 = shalt.err (%p465)

</llo_original>
